<compile_context>
chip_gen: v5e
topology: v5e:2x2
jax: 0.10.0
libtpu: 0.0.40
codegen_flags: <defaults>
</compile_context>

<pallas_src>
from functools import partial

import jax
import jax.numpy as jnp
from jax.experimental import pallas as pl
from jax.experimental.pallas import tpu as pltpu


HALO = 128  # lanes of next-row halo visible to each block; supports L <= 128 taps


def _fir_kernel(x_ref, nxt_ref, band_main_ref, band_halo_ref, o_ref, *, precision):
    """One row-block of the banded-matmul FIR.

    x_ref:         (RB, C)    current block of the row-major padded signal
    nxt_ref:       (8, HALO)  first rows of the *next* block (only row 0 used)
    band_main_ref: (C, CO)    banded Toeplitz taps (within-row contribution)
    band_halo_ref: (HALO, CO) banded taps for samples spilling into the next row
    o_ref:         (RB, CO)   strided FIR outputs for this block
    """
    x = x_ref[...]                                                   # (RB, C)
    # "Next row head" for every row r of the block: rows 1..RB-1 come from the
    # block itself; the last row's successor is row 0 of the next block.
    heads = jnp.concatenate([x[1:, :HALO], nxt_ref[:1, :]], axis=0)  # (RB, HALO)
    acc = jnp.dot(x, band_main_ref[...],
                  preferred_element_type=jnp.float32, precision=precision)
    acc = acc + jnp.dot(heads, band_halo_ref[...],
                        preferred_element_type=jnp.float32, precision=precision)
    o_ref[...] = acc.astype(o_ref.dtype)


def _build_bands(weights, stride, out_lanes, dtype):
    """Banded Toeplitz tap matrix (built once per filter, not per call).

    band[k, co] = w_flip[k - co*stride] if 0 <= k - co*stride < L else 0, so
      y[r, co] = sum_k X[r, k]   * band_main[k, co]
               + sum_k X[r+1, k] * band_halo[k, co]      (next-row spill)
    encodes the convolution flip, the 'same' alignment and the output stride.
    """
    w = jnp.asarray(weights, dtype=jnp.float32)
    L = w.shape[0]
    s = int(stride)
    CO = int(out_lanes)
    C = CO * s
    wf = w[::-1]
    k_idx = jnp.arange(C + HALO, dtype=jnp.int32)[:, None]
    c_idx = jnp.arange(CO, dtype=jnp.int32)[None, :]
    tap = k_idx - c_idx * s
    band = jnp.where((tap >= 0) & (tap < L),
                     wf[jnp.clip(tap, 0, L - 1)],
                     jnp.float32(0.0)).astype(dtype)
    return band[:C], band[C:]


def _pick_rows_per_block(r_out, c, target_bytes=2 << 20, max_rows=2048):
    """Size RB by block bytes (~2 MiB x-tile), multiple of 8, >= 2 grid steps."""
    r_out8 = -(-r_out // 8) * 8
    rb = (target_bytes // (c * 4)) // 8 * 8
    rb = int(max(8, min(max_rows, rb)))
    rb = min(rb, r_out8)
    # Prefer >= 2 grid steps so v7x's second TensorCore gets work.
    if rb >= r_out8 and r_out8 >= 16:
        rb = -(-(r_out8 // 2) // 8) * 8
    return int(rb)


def _fir_forward(x, band_main, band_halo, *, filter_length, stride, out_lanes,
                 rows_per_block, precision, compute_dtype):
    N = x.shape[0]
    L = int(filter_length)
    s = int(stride)
    CO = int(out_lanes)
    assert s >= 1
    assert CO % 128 == 0
    assert 1 <= L <= HALO, "filter length must be <= 128 for this kernel"
    assert L <= N, "filter longer than signal not supported (changes 'same' length)"

    C = CO * s                       # input samples consumed per output row
    M = -(-N // s)                   # ceil(N / stride): number of outputs
    R_out = -(-M // CO)              # rows that carry real outputs

    if rows_per_block is None:
        RB = _pick_rows_per_block(R_out, C)
    else:
        RB = int(rows_per_block)
    assert RB % 8 == 0 and RB >= 8

    G = -(-R_out // RB)              # grid steps
    R_pad = G * RB                   # output rows (padded)
    R_tot = R_pad + 8                # 8 extra zero rows back the last halo fetch

    # numpy convolve(mode='same') centering: same = full[(L-1)//2 : (L-1)//2 + N]
    c0 = (L - 1) // 2
    pad_left = L - 1 - c0

    # Flat padded signal laid out row-major as (R_tot, C) - a pure reshape of
    # one pad op, no data duplication, no separate gather pass.
    xd = x.astype(compute_dtype)
    xe = jnp.pad(xd, (pad_left, R_tot * C - pad_left - N))
    X = xe.reshape(R_tot, C)

    rb8 = RB // 8
    itemsize = jnp.dtype(compute_dtype).itemsize
    # Explicit VMEM budget: every operand is double-buffered by the pipeline
    # (even the constant-index-map bands), the output is f32.
    vmem_bytes = (2 * (RB * C + 8 * HALO + (C + HALO) * CO) * itemsize
                  + 2 * RB * CO * 4)
    vmem_limit = int(min(96 * 1024 * 1024, max(vmem_bytes + (4 << 20), 16 << 20)))

    out = pl.pallas_call(
        partial(_fir_kernel, precision=precision),
        grid=(G,),
        in_specs=[
            # current rows of the signal
            pl.BlockSpec((RB, C), lambda i: (i, 0)),
            # first 8 rows x 128 lanes of the *next* block (halo; row 0 used)
            pl.BlockSpec((8, HALO), lambda i: ((i + 1) * rb8, 0)),
            # band matrices: constant index map -> DMA'd once, resident in VMEM
            pl.BlockSpec((C, CO), lambda i: (0, 0)),
            pl.BlockSpec((HALO, CO), lambda i: (0, 0)),
        ],
        out_specs=pl.BlockSpec((RB, CO), lambda i: (i, 0)),
        out_shape=jax.ShapeDtypeStruct((R_pad, CO), jnp.float32),
        compiler_params=pltpu.CompilerParams(
            dimension_semantics=("parallel",),   # shards grid across v7x's 2 TCs
            vmem_limit_bytes=vmem_limit,
        ),
    )(X, X, band_main, band_halo)

    # Padded rows beyond M are discarded; this is a tiny slice, not a full pass.
    return out.reshape(-1)[:M]


def make_fir_filter(filter_weights, stride=1, *, out_lanes=128, rows_per_block=None,
                    precision=jax.lax.Precision.DEFAULT,
                    compute_dtype=jnp.float32):
    """Module-style constructor: build the banded tap matrices once, return a
    jitted forward(x) == convolve(x, filter_weights, mode='same')[::stride]."""
    L = int(jnp.asarray(filter_weights).shape[0])
    band_main, band_halo = _build_bands(filter_weights, stride, out_lanes,
                                        compute_dtype)
    fwd = partial(_fir_forward,
                  filter_length=L, stride=int(stride), out_lanes=int(out_lanes),
                  rows_per_block=rows_per_block, precision=precision,
                  compute_dtype=compute_dtype)

    @jax.jit
    def forward(x):
        return fwd(x, band_main, band_halo)

    return forward


def fir_filter(x, weights, stride=1, **kwargs):
    """One-shot convenience wrapper (rebuilds the band matrices每 call)."""
    return make_fir_filter(weights, stride, **kwargs)(x)


if __name__ == "__main__":
    key = jax.random.PRNGKey(0)

    def hann_lowpass(L):
        n = jnp.arange(L, dtype=jnp.float32)
        win = 0.5 - 0.5 * jnp.cos(2.0 * jnp.pi * n / (L - 1))
        return win / jnp.sum(win)

    # (N, stride, L, kwargs, tolerance)
    cases = [
        (2048, 2, 15, {}, 1e-2),                                  # halo row with real data
        (4096, 1, 15, dict(rows_per_block=8), 1e-2),              # forced 4-step grid
        (300, 3, 9, {}, 1e-2),                                    # ragged sizes, ceil(N/stride)
        (500, 4, 12, {}, 1e-2),                                   # even filter length
        (16384, 1, 31, {}, 1e-2),                                 # auto RB, >=2 grid steps
        (2048, 2, 15, dict(compute_dtype=jnp.bfloat16), 2e-2),    # bf16 input path
    ]
    for idx, (N, s, L, kw, tol) in enumerate(cases):
        k = jax.random.fold_in(key, idx)
        x = jax.random.normal(k, (N,), dtype=jnp.float32)
        w = hann_lowpass(L)

        fir = make_fir_filter(w, stride=s, **kw)
        y = jax.block_until_ready(fir(x))

        y_ref = jnp.convolve(x, w, mode="same",
                             precision=jax.lax.Precision.HIGHEST)[::s]
        assert y.shape == y_ref.shape, (y.shape, y_ref.shape)
        # DEFAULT-precision MXU passes (bf16 multiplicands, f32 accumulation)
        # give ~1e-3 max error for f32 inputs, ~4e-3 for bf16 inputs; any
        # indexing/centering/stride bug produces O(0.1) errors, so these
        # tolerances still catch real mistakes.
        err = float(jnp.max(jnp.abs(y - y_ref)))
        assert jnp.allclose(y, y_ref, rtol=tol, atol=tol), (N, s, L, err)

    print("KERNEL_OK")
</pallas_src>

<mosaic_0001>
module attributes {stable_mosaic.version = 11 : i64} {
  func.func @_fir_kernel(%arg0: i32, %arg1: memref<8x256xf32, #tpu.memory_space<vmem>>, %arg2: memref<8x128xf32, #tpu.memory_space<vmem>>, %arg3: memref<256x128xf32, #tpu.memory_space<vmem>>, %arg4: memref<128x128xf32, #tpu.memory_space<vmem>>, %arg5: memref<8x128xf32, #tpu.memory_space<vmem>>) attributes {dimension_semantics = [#tpu.dimension_semantics<parallel>], iteration_bounds = array<i64: 1>, scalar_prefetch = 0 : i64, scratch_operands = 0 : i64, tpu.core_type = #tpu.core_type<tc>, window_params = [{transform_indices = @transform_0, window_bounds = array<i64: 8, 256>}, {transform_indices = @transform_1, window_bounds = array<i64: 8, 128>}, {pipeline_mode = #tpu.pipeline_mode<synchronous>, transform_indices = @transform_2, window_bounds = array<i64: 256, 128>}, {pipeline_mode = #tpu.pipeline_mode<synchronous>, transform_indices = @transform_3, window_bounds = array<i64: 128, 128>}, {transform_indices = @transform_4, window_bounds = array<i64: 8, 128>}]} {
    %c0 = arith.constant 0 : index
    %c0_0 = arith.constant 0 : index
    %0 = vector.load %arg1[%c0, %c0_0] : memref<8x256xf32, #tpu.memory_space<vmem>>, vector<8x256xf32>
    %1 = vector.extract_strided_slice %0 {offsets = [1, 0], sizes = [7, 128], strides = [1, 1]} : vector<8x256xf32> to vector<7x128xf32>
    %c0_1 = arith.constant 0 : index
    %c0_2 = arith.constant 0 : index
    %2 = vector.load %arg2[%c0_1, %c0_2] : memref<8x128xf32, #tpu.memory_space<vmem>>, vector<1x128xf32>
    %3 = tpu.concatenate %1, %2 in 0 : vector<7x128xf32>, vector<1x128xf32> -> vector<8x128xf32>
    %c0_3 = arith.constant 0 : index
    %c0_4 = arith.constant 0 : index
    %4 = vector.load %arg3[%c0_3, %c0_4] : memref<256x128xf32, #tpu.memory_space<vmem>>, vector<256x128xf32>
    %cst = arith.constant dense<0.000000e+00> : vector<8x128xf32>
    %5 = tpu.matmul %0, %4, %cst {dimension_numbers = #tpu.dot_dimension_numbers<[1], [0], [0], [1], [0, 0, 1, 1], [], []>} : vector<8x256xf32>, vector<256x128xf32>, vector<8x128xf32> -> vector<8x128xf32>
    %c0_5 = arith.constant 0 : index
    %c0_6 = arith.constant 0 : index
    %6 = vector.load %arg4[%c0_5, %c0_6] : memref<128x128xf32, #tpu.memory_space<vmem>>, vector<128x128xf32>
    %cst_7 = arith.constant dense<0.000000e+00> : vector<8x128xf32>
    %7 = tpu.matmul %3, %6, %cst_7 {dimension_numbers = #tpu.dot_dimension_numbers<[1], [0], [0], [1], [0, 0, 1, 1], [], []>} : vector<8x128xf32>, vector<128x128xf32>, vector<8x128xf32> -> vector<8x128xf32>
    %8 = arith.addf %5, %7 : vector<8x128xf32>
    %c0_8 = arith.constant 0 : index
    %c0_9 = arith.constant 0 : index
    %9 = vector.load %arg5[%c0_8, %c0_9] : memref<8x128xf32, #tpu.memory_space<vmem>>, vector<8x128xf32>
    tpu.vector_store %arg5[%c0_8, %c0_9], %8 {strides = array<i32>} : memref<8x128xf32, #tpu.memory_space<vmem>>, vector<8x128xf32>,
    return
  }
  func.func @transform_0(%arg0: i32) -> (i32, i32) {
    %c0_i32 = arith.constant 0 : i32
    %c0_i32_0 = arith.constant 0 : i32
    return %arg0, %c0_i32 : i32, i32
  }
  func.func @transform_1(%arg0: i32) -> (i32, i32) {
    %c1_i32 = arith.constant 1 : i32
    %0 = arith.addi %arg0, %c1_i32 : i32
    %c1_i32_0 = arith.constant 1 : i32
    %1 = arith.muli %0, %c1_i32_0 : i32
    %c0_i32 = arith.constant 0 : i32
    %c0_i32_1 = arith.constant 0 : i32
    return %1, %c0_i32 : i32, i32
  }
  func.func @transform_2(%arg0: i32) -> (i32, i32) {
    %c0_i32 = arith.constant 0 : i32
    %c0_i32_0 = arith.constant 0 : i32
    %c0_i32_1 = arith.constant 0 : i32
    return %c0_i32, %c0_i32_0 : i32, i32
  }
  func.func @transform_3(%arg0: i32) -> (i32, i32) {
    %c0_i32 = arith.constant 0 : i32
    %c0_i32_0 = arith.constant 0 : i32
    %c0_i32_1 = arith.constant 0 : i32
    return %c0_i32, %c0_i32_0 : i32, i32
  }
  func.func @transform_4(%arg0: i32) -> (i32, i32) {
    %c0_i32 = arith.constant 0 : i32
    %c0_i32_0 = arith.constant 0 : i32
    return %arg0, %c0_i32 : i32, i32
  }
}

</mosaic_0001>

<llo_original>
// kernel: forward.1
$region0: #{forward.1}
  #allocation0 [shape = 'u32[]', space=smem, size = 0x4, offset = 0x4, fixed_abs, tag = 'smem constant byte address 0x4 - core index']
  #allocation1 [shape = 'u32[72,128]{1,0:T(1,128)}', space=vmem, size = 0x9000, scoped, tag = 'internal scratch']
  %s0 = inlined_call_operand.vmem [shape: f32[16,256], index: 0, kind: input, shape index: {}, may-alias: {0,1}]
  %s1 = inlined_call_operand.vmem [shape: f32[16,256], index: 1, kind: input, shape index: {}, may-alias: {0,1}]
  %s2 = inlined_call_operand.hbm [shape: f32[256,128], index: 2, kind: input, shape index: {}]
  %s3 = inlined_call_operand.hbm [shape: f32[128,128], index: 3, kind: input, shape index: {}]
  %s4 = inlined_call_operand.hbm [shape: f32[8,128], index: 4, kind: output, shape index: {}]
  %s5 = sld [smem:[#allocation0]]
  $region34: #{forward.1} parent=0
    _
  %s7 = ssub.s32 1, %s5
  %s8 = scalar_select 0, %s7, %s5
  $region1: #{forward.1} parent=0
    #allocation2 [shape = 'u8[131072]{0}', space=vmem, size = 0x20000, scoped, tag = 'input window, operand 2, single buffered']
    #allocation3 [shape = 's32[1]{0}', space=sflag, size = 0x4, scoped, tag = 'scoped memory for forward.1']
    #allocation4 [shape = 's32[1]{0}', space=sflag, size = 0x4, scoped, tag = 'scoped memory for forward.1']
    #allocation5 [shape = 'u8[65536]{0}', space=vmem, size = 0x10000, scoped, tag = 'input window, operand 3, single buffered']
    #allocation6 [shape = 's32[1]{0}', space=sflag, size = 0x4, scoped, tag = 'scoped memory for forward.1']
    #allocation7 [shape = 'u8[4096]{0}', space=vmem, size = 0x1000, scoped, tag = 'output window, operand 0, single buffered']
    %9 = vsyncpa [#allocation3], 0
    %10 = vsyncpa [#allocation6], 0
    %11 = vsyncpa [#allocation4], 0
    // Predicated region
    $region2: #{forward.1} parent=1 // pred_check
      _
    $region3: #{forward.1} parent=1 // pred_check_branch
      %13 = sbr.rel (0) target = $region5
    $region4: #{forward.1} parent=1 // pred_region
      _
    $region5: #{forward.1} parent=1 // pred_fallthru
      _
    // Predicated region
    $region6: #{forward.1} parent=1 // pred_check
      _
    $region7: #{forward.1} parent=1 // pred_check_branch
      %15 = sbr.rel (0) target = $region9
    $region8: #{forward.1} parent=1 // pred_region
      %s16 = sadd.s32 0, 1
      %p17 = scmp.lt.s32.totalorder %s16, 1
      %s18 = scalar_select %p17, %s16, 1
      %s19 = smul.addr %s18, 2
      %s20 = smul.addr %s19, 8
      %s21 = scalar_lea.vmem %s1, %s20
      %s22 = sadd.s32 0, 1
    $region9: #{forward.1} parent=1 // pred_fallthru
      _
    // Predicated region
    $region10: #{forward.1} parent=1 // pred_check
      _
    $region11: #{forward.1} parent=1 // pred_check_branch
      %24 = sbr.rel (0) target = $region13
    $region12: #{forward.1} parent=1 // pred_region
      %26 = vsyncadd [#allocation3], 0
      %s27 = sshll.u32 %s2, 4
      %s28 = int_to_ptr.hbm [resolvable:$true] %s27
      %s29 = sshll.u32 [#allocation2], 4
      %s30 = int_to_ptr.vmem [resolvable:$true] %s29
      %35 = dma.hbm_to_vmem [thread:$0]  %s28, 4096, %s30, [#allocation3], 128, 128, 8
    $region13: #{forward.1} parent=1 // pred_fallthru
      _
    // Predicated region
    $region14: #{forward.1} parent=1 // pred_check
      _
    $region15: #{forward.1} parent=1 // pred_check_branch
      %37 = sbr.rel (0) target = $region17
    $region16: #{forward.1} parent=1 // pred_region
      %39 = vsyncadd [#allocation6], 0
      %s40 = sshll.u32 %s3, 4
      %s41 = int_to_ptr.hbm [resolvable:$true] %s40
      %s42 = sshll.u32 [#allocation5], 4
      %s43 = int_to_ptr.vmem [resolvable:$true] %s42
      %48 = dma.hbm_to_vmem [thread:$0]  %s41, 2048, %s43, [#allocation6], 128, 128, 8
    $region17: #{forward.1} parent=1 // pred_fallthru
      _
    // Predicated region
    $region18: #{forward.1} parent=1 // pred_check
      _
    $region19: #{forward.1} parent=1 // pred_check_branch
      %50 = sbr.rel (0) target = $region21
    $region20: #{forward.1} parent=1 // pred_region
      %52 = dma.done [#allocation3], 4096
    $region21: #{forward.1} parent=1 // pred_fallthru
      _
    // Predicated region
    $region22: #{forward.1} parent=1 // pred_check
      _
    $region23: #{forward.1} parent=1 // pred_check_branch
      %54 = sbr.rel (0) target = $region25
    $region24: #{forward.1} parent=1 // pred_region
      %56 = dma.done [#allocation6], 2048
    $region25: #{forward.1} parent=1 // pred_fallthru
      _
    %s57 = sadd.s32 0, 1
    %p58 = scmp.lt.s32.totalorder %s57, 1
    %s59 = scalar_select %p58, %s57, 1
    %s60 = smul.addr %s59, 2
    %s61 = smul.addr %s60, 8
    %s62 = scalar_lea.vmem %s1, %s61
    %s63 = sadd.s32 0, 1
    %p64 = scmp.lt.s32.totalorder %s63, 1
    %s65 = scalar_select %p64, %s63, 1
    %s66 = smul.addr %s65, 2
    %s67 = smul.addr %s66, 8
    %s68 = scalar_lea.vmem %s1, %s67
    %s69 = sadd.s32 0, 1
    %v70 = vld [vmem:[%s0] sm:$0xff]
    %v71 = vld [vmem:[%s0 + $0x8] sm:$0xff]
    %v72 = vld [vmem:[%s68] sm:$0x1]
    %v74 = vrot.slane %v70, 1
    %v77 = vrot.slane %v72, 1
    %vm79 = vcmask 1046528
    %v80 = vsel %vm79, %v74, %v77
    %v81 = vld [vmem:[#allocation2] sm:$0xff]
    %v82 = vld [vmem:[#allocation2 + $0x8] sm:$0xff]
    %v83 = vld [vmem:[#allocation2 + $0x10] sm:$0xff]
    %v84 = vld [vmem:[#allocation2 + $0x18] sm:$0xff]
    %v85 = vld [vmem:[#allocation2 + $0x20] sm:$0xff]
    %v86 = vld [vmem:[#allocation2 + $0x28] sm:$0xff]
    %v87 = vld [vmem:[#allocation2 + $0x30] sm:$0xff]
    %v88 = vld [vmem:[#allocation2 + $0x38] sm:$0xff]
    %v89 = vld [vmem:[#allocation2 + $0x40] sm:$0xff]
    %v90 = vld [vmem:[#allocation2 + $0x48] sm:$0xff]
    %v91 = vld [vmem:[#allocation2 + $0x50] sm:$0xff]
    %v92 = vld [vmem:[#allocation2 + $0x58] sm:$0xff]
    %v93 = vld [vmem:[#allocation2 + $0x60] sm:$0xff]
    %v94 = vld [vmem:[#allocation2 + $0x68] sm:$0xff]
    %v95 = vld [vmem:[#allocation2 + $0x70] sm:$0xff]
    %v96 = vld [vmem:[#allocation2 + $0x78] sm:$0xff]
    %v97 = vld [vmem:[#allocation2 + $0x80] sm:$0xff]
    %v98 = vld [vmem:[#allocation2 + $0x88] sm:$0xff]
    %v99 = vld [vmem:[#allocation2 + $0x90] sm:$0xff]
    %v100 = vld [vmem:[#allocation2 + $0x98] sm:$0xff]
    %v101 = vld [vmem:[#allocation2 + $0xa0] sm:$0xff]
    %v102 = vld [vmem:[#allocation2 + $0xa8] sm:$0xff]
    %v103 = vld [vmem:[#allocation2 + $0xb0] sm:$0xff]
    %v104 = vld [vmem:[#allocation2 + $0xb8] sm:$0xff]
    %v105 = vld [vmem:[#allocation2 + $0xc0] sm:$0xff]
    %v106 = vld [vmem:[#allocation2 + $0xc8] sm:$0xff]
    %v107 = vld [vmem:[#allocation2 + $0xd0] sm:$0xff]
    %v108 = vld [vmem:[#allocation2 + $0xd8] sm:$0xff]
    %v109 = vld [vmem:[#allocation2 + $0xe0] sm:$0xff]
    %v110 = vld [vmem:[#allocation2 + $0xe8] sm:$0xff]
    %v111 = vld [vmem:[#allocation2 + $0xf0] sm:$0xff]
    %v112 = vld [vmem:[#allocation2 + $0xf8] sm:$0xff]
    %v113 = vld [vmem:[#allocation5] sm:$0xff]
    %v114 = vld [vmem:[#allocation5 + $0x8] sm:$0xff]
    %v115 = vld [vmem:[#allocation5 + $0x10] sm:$0xff]
    %v116 = vld [vmem:[#allocation5 + $0x18] sm:$0xff]
    %v117 = vld [vmem:[#allocation5 + $0x20] sm:$0xff]
    %v118 = vld [vmem:[#allocation5 + $0x28] sm:$0xff]
    %v119 = vld [vmem:[#allocation5 + $0x30] sm:$0xff]
    %v120 = vld [vmem:[#allocation5 + $0x38] sm:$0xff]
    %v121 = vld [vmem:[#allocation5 + $0x40] sm:$0xff]
    %v122 = vld [vmem:[#allocation5 + $0x48] sm:$0xff]
    %v123 = vld [vmem:[#allocation5 + $0x50] sm:$0xff]
    %v124 = vld [vmem:[#allocation5 + $0x58] sm:$0xff]
    %v125 = vld [vmem:[#allocation5 + $0x60] sm:$0xff]
    %v126 = vld [vmem:[#allocation5 + $0x68] sm:$0xff]
    %v127 = vld [vmem:[#allocation5 + $0x70] sm:$0xff]
    %v128 = vld [vmem:[#allocation5 + $0x78] sm:$0xff]
    %129 = vmatpush.msra.mxu0 %v128
    %130 = vmatpush.msra.mxu0 %v127
    %131 = vmatpush.msra.mxu0 %v126
    %132 = vmatpush.msra.mxu0 %v125
    %133 = vmatpush.msra.mxu0 %v124
    %134 = vmatpush.msra.mxu0 %v123
    %135 = vmatpush.msra.mxu0 %v122
    %136 = vmatpush.msra.mxu0 %v121
    %137 = vmatpush.msra.mxu0 %v120
    %138 = vmatpush.msra.mxu0 %v119
    %139 = vmatpush.msra.mxu0 %v118
    %140 = vmatpush.msra.mxu0 %v117
    %141 = vmatpush.msra.mxu0 %v116
    %142 = vmatpush.msra.mxu0 %v115
    %143 = vmatpush.msra.mxu0 %v114
    %144 = vmatpush.msra.mxu0 %v113
    %145 = vmatmul.f32.gmra.mxu0 %v80
    %v146 = vpop.f32.mrf.mxu0
    %v147 = vadd.f32 0.0, %v146
    %148 = vdwg.mxu0
    %149 = vmatpush.msra.mxu0 %v96
    %150 = vmatpush.msra.mxu0 %v95
    %151 = vmatpush.msra.mxu0 %v94
    %152 = vmatpush.msra.mxu0 %v93
    %153 = vmatpush.msra.mxu0 %v92
    %154 = vmatpush.msra.mxu0 %v91
    %155 = vmatpush.msra.mxu0 %v90
    %156 = vmatpush.msra.mxu0 %v89
    %157 = vmatpush.msra.mxu0 %v88
    %158 = vmatpush.msra.mxu0 %v87
    %159 = vmatpush.msra.mxu0 %v86
    %160 = vmatpush.msra.mxu0 %v85
    %161 = vmatpush.msra.mxu0 %v84
    %162 = vmatpush.msra.mxu0 %v83
    %163 = vmatpush.msra.mxu0 %v82
    %164 = vmatpush.msra.mxu0 %v81
    %165 = vmatmul.f32.gmra.mxu0 %v70
    %v166 = vpop.f32.mrf.mxu0
    %v167 = vadd.f32 %v147, %v166
    %168 = vdwg.mxu0
    %169 = vmatpush.msra.mxu0 %v112
    %170 = vmatpush.msra.mxu0 %v111
    %171 = vmatpush.msra.mxu0 %v110
    %172 = vmatpush.msra.mxu0 %v109
    %173 = vmatpush.msra.mxu0 %v108
    %174 = vmatpush.msra.mxu0 %v107
    %175 = vmatpush.msra.mxu0 %v106
    %176 = vmatpush.msra.mxu0 %v105
    %177 = vmatpush.msra.mxu0 %v104
    %178 = vmatpush.msra.mxu0 %v103
    %179 = vmatpush.msra.mxu0 %v102
    %180 = vmatpush.msra.mxu0 %v101
    %181 = vmatpush.msra.mxu0 %v100
    %182 = vmatpush.msra.mxu0 %v99
    %183 = vmatpush.msra.mxu0 %v98
    %184 = vmatpush.msra.mxu0 %v97
    %185 = vmatmul.f32.gmra.mxu0 %v71
    %v186 = vpop.f32.mrf.mxu0
    %v187 = vadd.f32 %v167, %v186
    %188 = vdwg.mxu0
    %189 = vst [vmem:[#allocation7] sm:$0xff] %v187
    // Predicated region
    $region26: #{forward.1} parent=1 // pred_check
      _
    $region27: #{forward.1} parent=1 // pred_check_branch
      %191 = sbr.rel (0) target = $region29
    $region28: #{forward.1} parent=1 // pred_region
      %193 = vsyncadd [#allocation4], 0
      %s195 = sshll.u32 [#allocation7], 4
      %s196 = int_to_ptr.vmem [resolvable:$true] %s195
      %s197 = sshll.u32 %s4, 4
      %s198 = int_to_ptr.hbm [resolvable:$true] %s197
      %200 = dma.vmem_to_hbm [thread:$0]  %s196, 128, %s198, [#allocation4]
    $region29: #{forward.1} parent=1 // pred_fallthru
      _
    // Predicated region
    $region30: #{forward.1} parent=1 // pred_check
      _
    $region31: #{forward.1} parent=1 // pred_check_branch
      %202 = sbr.rel (0) target = $region33
    $region32: #{forward.1} parent=1 // pred_region
      %204 = dma.done [#allocation4], 128
    $region33: #{forward.1} parent=1 // pred_fallthru
      _
    %205 = vsyncpa [#allocation3], 1
    %206 = vsyncpa [#allocation6], 1
    %207 = vsyncpa [#allocation4], 1

</llo_original>
